<compile_context>
chip_gen: v5e
topology: v5e:2x2
jax: 0.10.0
libtpu: 0.0.40
codegen_flags: <defaults>
</compile_context>

<pallas_src>
import functools

import jax
import jax.numpy as jnp
from jax.experimental import pallas as pl
from jax.experimental.pallas import tpu as pltpu


def safe_critic_kernel(
    state_ref, action_ref,
    w1s_ref, w1a_ref, b1_ref,
    q1_w2_ref, q1_b2_ref,
    q2_w2_ref, q2_b2_ref,
    w3_ref, b3_ref,
    out_ref,
):
    H = q1_w2_ref.shape[0]
    w_dt = q1_w2_ref.dtype

    # Fused layer 1 for both heads, split over state/action so the concat
    # never round-trips through HBM:  h = [state action] @ [[W1s];[W1a]] + b1
    h = jnp.dot(state_ref[...], w1s_ref[...], preferred_element_type=jnp.float32)
    h = h + jnp.dot(action_ref[...], w1a_ref[...], preferred_element_type=jnp.float32)
    h = jnp.maximum(h + b1_ref[...].astype(jnp.float32), 0.0)        # [TB, 2H]

    h1 = h[:, :H]
    h2 = h[:, H:]

    # Layer 2 per head (MXU, f32 accumulation).
    h1 = jnp.dot(h1.astype(w_dt), q1_w2_ref[...], preferred_element_type=jnp.float32)
    h1 = jnp.maximum(h1 + q1_b2_ref[...].astype(jnp.float32), 0.0)
    h2 = jnp.dot(h2.astype(w_dt), q2_w2_ref[...], preferred_element_type=jnp.float32)
    h2 = jnp.maximum(h2 + q2_b2_ref[...].astype(jnp.float32), 0.0)

    # Layer 3 ([H] -> 1) on the VPU/XLU: broadcast multiply + lane reduction,
    # keeping the MXU free for the wide matmuls.
    w3 = w3_ref[...].astype(jnp.float32)        # [2, H]: row 0 = q1, row 1 = q2
    b3 = b3_ref[...].astype(jnp.float32)        # [1, 2]
    q1 = jnp.sum(h1 * w3[0:1, :], axis=-1, keepdims=True) + b3[:, 0:1]
    q2 = jnp.sum(h2 * w3[1:2, :], axis=-1, keepdims=True) + b3[:, 1:2]

    out_ref[:, 0:1] = q1.astype(out_ref.dtype)
    out_ref[:, 1:2] = q2.astype(out_ref.dtype)


def init_safe_critic_params(key, state_dim, action_dim, hidden_dim=256,
                            dtype=jnp.float32):
    """PyTorch-style init. Weights stored transposed as [in, out], biases [1, out]."""
    in_dim = state_dim + action_dim
    layer_dims = [(in_dim, hidden_dim), (hidden_dim, hidden_dim), (hidden_dim, 1)]
    params = {}
    for head in ("q1", "q2"):
        for li, (fan_in, fan_out) in enumerate(layer_dims, start=1):
            key, kw, kb = jax.random.split(key, 3)
            bound = 1.0 / jnp.sqrt(float(fan_in))
            params[f"{head}_w{li}"] = jax.random.uniform(
                kw, (fan_in, fan_out), dtype, minval=-bound, maxval=bound)
            params[f"{head}_b{li}"] = jax.random.uniform(
                kb, (1, fan_out), dtype, minval=-bound, maxval=bound)
    return params


@functools.partial(jax.jit, static_argnames=("block_batch",))
def safe_critic_forward(state, action, params, *, block_batch=512):
    """Forward pass equivalent to SafeCritic.forward(state, action)."""
    batch, state_dim = state.shape
    action_dim = action.shape[1]
    hidden = params["q1_w2"].shape[0]
    w_dtype = params["q1_w1"].dtype
    in_dim = state_dim + action_dim

    # ---- pack weights (tiny): fused layer-1 fills the MXU with N = 2H ----
    w1 = jnp.concatenate([params["q1_w1"], params["q2_w1"]], axis=1)      # [in, 2H]
    w1s = w1[:state_dim]                                                  # [S, 2H]
    w1a = w1[state_dim:]                                                  # [A, 2H]
    b1 = jnp.concatenate([params["q1_b1"], params["q2_b1"]], axis=1)      # [1, 2H]
    w3 = jnp.concatenate([params["q1_w3"].T, params["q2_w3"].T], axis=0)  # [2, H]
    b3 = jnp.concatenate([params["q1_b3"], params["q2_b3"]], axis=1)      # [1, 2]

    # Feed the MXU its native dtype directly (bf16 weights -> bf16 matmul).
    state = state.astype(w_dtype)
    action = action.astype(w_dtype)

    # ---- batch tiling: biggest tile that keeps VMEM small and pipelined ----
    if batch <= block_batch:
        tb = batch                          # single tile (block == full array)
    else:
        tb = max(8, (block_batch // 8) * 8)  # multiple of 8 sublanes
    grid = (pl.cdiv(batch, tb),)

    row = lambda d: pl.BlockSpec((tb, d), lambda i: (i, 0))
    resident = lambda a: pl.BlockSpec(a.shape, lambda i: (0, 0))

    itemsize = jnp.dtype(w_dtype).itemsize
    weight_elems = (in_dim * 2 * hidden + 2 * hidden * hidden + 2 * hidden
                    + 2 * hidden + 2 * hidden + 2)
    cost = pl.CostEstimate(
        flops=2 * batch * (in_dim * 2 * hidden + 2 * hidden * hidden + 2 * hidden),
        transcendentals=0,
        bytes_accessed=batch * in_dim * itemsize + weight_elems * itemsize
        + batch * 2 * 4,
    )

    q = pl.pallas_call(
        safe_critic_kernel,
        out_shape=jax.ShapeDtypeStruct((batch, 2), jnp.float32),
        grid=grid,
        in_specs=[
            row(state_dim), row(action_dim),
            resident(w1s), resident(w1a), resident(b1),
            resident(params["q1_w2"]), resident(params["q1_b2"]),
            resident(params["q2_w2"]), resident(params["q2_b2"]),
            resident(w3), resident(b3),
        ],
        out_specs=pl.BlockSpec((tb, 2), lambda i: (i, 0)),
        compiler_params=pltpu.CompilerParams(
            dimension_semantics=("parallel",),
            vmem_limit_bytes=32 * 1024 * 1024,
        ),
        cost_estimate=cost,
    )(state, action, w1s, w1a, b1,
      params["q1_w2"], params["q1_b2"], params["q2_w2"], params["q2_b2"],
      w3, b3)

    return q[:, 0:1], q[:, 1:2]


def _reference_forward(state, action, params):
    """Pure-JAX f32 reference matching the PyTorch module."""
    p = jax.tree_util.tree_map(lambda x: x.astype(jnp.float32), params)
    sa = jnp.concatenate(
        [state.astype(jnp.float32), action.astype(jnp.float32)], axis=1)

    def head(pref):
        h = jnp.maximum(sa @ p[f"{pref}_w1"] + p[f"{pref}_b1"], 0.0)
        h = jnp.maximum(h @ p[f"{pref}_w2"] + p[f"{pref}_b2"], 0.0)
        return h @ p[f"{pref}_w3"] + p[f"{pref}_b3"]

    return head("q1"), head("q2")


if __name__ == "__main__":
    key = jax.random.PRNGKey(0)

    # 1) Small fp32 check (single tile, block == full arrays).
    batch, state_dim, action_dim, hidden = 2, 8, 4, 32
    key, ks, ka, kp = jax.random.split(key, 4)
    state = jax.random.normal(ks, (batch, state_dim), jnp.float32)
    action = jax.random.normal(ka, (batch, action_dim), jnp.float32)
    params = init_safe_critic_params(kp, state_dim, action_dim, hidden)

    q1, q2 = safe_critic_forward(state, action, params)
    jax.block_until_ready((q1, q2))
    r1, r2 = _reference_forward(state, action, params)
    assert q1.shape == (batch, 1) and q2.shape == (batch, 1)
    assert jnp.allclose(q1, r1, atol=1e-4, rtol=1e-4)
    assert jnp.allclose(q2, r2, atol=1e-4, rtol=1e-4)

    # 2) Multi-tile fp32 check with a remainder tile (grid + pipelining path).
    batch2, sdim2, adim2 = 20, 12, 6
    key, ks, ka, kp = jax.random.split(key, 4)
    state2 = jax.random.normal(ks, (batch2, sdim2), jnp.float32)
    action2 = jax.random.normal(ka, (batch2, adim2), jnp.float32)
    params2 = init_safe_critic_params(kp, sdim2, adim2, hidden)

    q1, q2 = safe_critic_forward(state2, action2, params2, block_batch=8)
    jax.block_until_ready((q1, q2))
    r1, r2 = _reference_forward(state2, action2, params2)
    assert jnp.allclose(q1, r1, atol=1e-4, rtol=1e-4)
    assert jnp.allclose(q2, r2, atol=1e-4, rtol=1e-4)

    # 3) bf16 weights/activations (bf16 MXU path, f32 accumulation).
    params_bf16 = jax.tree_util.tree_map(
        lambda p: p.astype(jnp.bfloat16), params2)
    q1b, q2b = safe_critic_forward(state2, action2, params_bf16, block_batch=16)
    jax.block_until_ready((q1b, q2b))
    assert jnp.allclose(q1b, r1, atol=1e-1, rtol=1e-1)
    assert jnp.allclose(q2b, r2, atol=1e-1, rtol=1e-1)

    print("KERNEL_OK")
</pallas_src>

<mosaic_0001>
module attributes {stable_mosaic.version = 11 : i64} {
  func.func @safe_critic_kernel(%arg0: i32, %arg1: memref<2x8xf32, #tpu.memory_space<vmem>>, %arg2: memref<2x4xf32, #tpu.memory_space<vmem>>, %arg3: memref<8x64xf32, #tpu.memory_space<vmem>>, %arg4: memref<4x64xf32, #tpu.memory_space<vmem>>, %arg5: memref<1x64xf32, #tpu.memory_space<vmem>>, %arg6: memref<32x32xf32, #tpu.memory_space<vmem>>, %arg7: memref<1x32xf32, #tpu.memory_space<vmem>>, %arg8: memref<32x32xf32, #tpu.memory_space<vmem>>, %arg9: memref<1x32xf32, #tpu.memory_space<vmem>>, %arg10: memref<2x32xf32, #tpu.memory_space<vmem>>, %arg11: memref<1x2xf32, #tpu.memory_space<vmem>>, %arg12: memref<2x2xf32, #tpu.memory_space<vmem>>) attributes {dimension_semantics = [#tpu.dimension_semantics<parallel>], iteration_bounds = array<i64: 1>, scalar_prefetch = 0 : i64, scratch_operands = 0 : i64, tpu.core_type = #tpu.core_type<tc>, window_params = [{transform_indices = @transform_0, window_bounds = array<i64: 2, 8>}, {transform_indices = @transform_1, window_bounds = array<i64: 2, 4>}, {pipeline_mode = #tpu.pipeline_mode<synchronous>, transform_indices = @transform_2, window_bounds = array<i64: 8, 64>}, {pipeline_mode = #tpu.pipeline_mode<synchronous>, transform_indices = @transform_3, window_bounds = array<i64: 4, 64>}, {pipeline_mode = #tpu.pipeline_mode<synchronous>, transform_indices = @transform_4, window_bounds = array<i64: 1, 64>}, {pipeline_mode = #tpu.pipeline_mode<synchronous>, transform_indices = @transform_5, window_bounds = array<i64: 32, 32>}, {pipeline_mode = #tpu.pipeline_mode<synchronous>, transform_indices = @transform_6, window_bounds = array<i64: 1, 32>}, {pipeline_mode = #tpu.pipeline_mode<synchronous>, transform_indices = @transform_7, window_bounds = array<i64: 32, 32>}, {pipeline_mode = #tpu.pipeline_mode<synchronous>, transform_indices = @transform_8, window_bounds = array<i64: 1, 32>}, {pipeline_mode = #tpu.pipeline_mode<synchronous>, transform_indices = @transform_9, window_bounds = array<i64: 2, 32>}, {pipeline_mode = #tpu.pipeline_mode<synchronous>, transform_indices = @transform_10, window_bounds = array<i64: 1, 2>}, {transform_indices = @transform_11, window_bounds = array<i64: 2, 2>}]} {
    %c0 = arith.constant 0 : index
    %c0_0 = arith.constant 0 : index
    %0 = vector.load %arg1[%c0, %c0_0] : memref<2x8xf32, #tpu.memory_space<vmem>>, vector<2x8xf32>
    %c0_1 = arith.constant 0 : index
    %c0_2 = arith.constant 0 : index
    %1 = vector.load %arg3[%c0_1, %c0_2] : memref<8x64xf32, #tpu.memory_space<vmem>>, vector<8x64xf32>
    %cst = arith.constant dense<0.000000e+00> : vector<2x64xf32>
    %2 = tpu.matmul %0, %1, %cst {dimension_numbers = #tpu.dot_dimension_numbers<[1], [0], [0], [1], [0, 0, 1, 1], [], []>} : vector<2x8xf32>, vector<8x64xf32>, vector<2x64xf32> -> vector<2x64xf32>
    %c0_3 = arith.constant 0 : index
    %c0_4 = arith.constant 0 : index
    %3 = vector.load %arg2[%c0_3, %c0_4] : memref<2x4xf32, #tpu.memory_space<vmem>>, vector<2x4xf32>
    %c0_5 = arith.constant 0 : index
    %c0_6 = arith.constant 0 : index
    %4 = vector.load %arg4[%c0_5, %c0_6] : memref<4x64xf32, #tpu.memory_space<vmem>>, vector<4x64xf32>
    %cst_7 = arith.constant dense<0.000000e+00> : vector<2x64xf32>
    %5 = tpu.matmul %3, %4, %cst_7 {dimension_numbers = #tpu.dot_dimension_numbers<[1], [0], [0], [1], [0, 0, 1, 1], [], []>} : vector<2x4xf32>, vector<4x64xf32>, vector<2x64xf32> -> vector<2x64xf32>
    %6 = arith.addf %2, %5 : vector<2x64xf32>
    %c0_8 = arith.constant 0 : index
    %c0_9 = arith.constant 0 : index
    %7 = vector.load %arg5[%c0_8, %c0_9] : memref<1x64xf32, #tpu.memory_space<vmem>>, vector<1x64xf32>
    %8 = vector.broadcast %7 : vector<1x64xf32> to vector<2x64xf32>
    %9 = arith.addf %6, %8 : vector<2x64xf32>
    %cst_10 = arith.constant 0.000000e+00 : f32
    %10 = vector.broadcast %cst_10 : f32 to vector<2x64xf32>
    %11 = arith.maximumf %9, %10 : vector<2x64xf32>
    %12 = vector.extract_strided_slice %11 {offsets = [0, 0], sizes = [2, 32], strides = [1, 1]} : vector<2x64xf32> to vector<2x32xf32>
    %13 = vector.extract_strided_slice %11 {offsets = [0, 32], sizes = [2, 32], strides = [1, 1]} : vector<2x64xf32> to vector<2x32xf32>
    %c0_11 = arith.constant 0 : index
    %c0_12 = arith.constant 0 : index
    %14 = vector.load %arg6[%c0_11, %c0_12] : memref<32x32xf32, #tpu.memory_space<vmem>>, vector<32x32xf32>
    %cst_13 = arith.constant dense<0.000000e+00> : vector<2x32xf32>
    %15 = tpu.matmul %12, %14, %cst_13 {dimension_numbers = #tpu.dot_dimension_numbers<[1], [0], [0], [1], [0, 0, 1, 1], [], []>} : vector<2x32xf32>, vector<32x32xf32>, vector<2x32xf32> -> vector<2x32xf32>
    %c0_14 = arith.constant 0 : index
    %c0_15 = arith.constant 0 : index
    %16 = vector.load %arg7[%c0_14, %c0_15] : memref<1x32xf32, #tpu.memory_space<vmem>>, vector<1x32xf32>
    %17 = vector.broadcast %16 : vector<1x32xf32> to vector<2x32xf32>
    %18 = arith.addf %15, %17 : vector<2x32xf32>
    %cst_16 = arith.constant 0.000000e+00 : f32
    %19 = vector.broadcast %cst_16 : f32 to vector<2x32xf32>
    %20 = arith.maximumf %18, %19 : vector<2x32xf32>
    %c0_17 = arith.constant 0 : index
    %c0_18 = arith.constant 0 : index
    %21 = vector.load %arg8[%c0_17, %c0_18] : memref<32x32xf32, #tpu.memory_space<vmem>>, vector<32x32xf32>
    %cst_19 = arith.constant dense<0.000000e+00> : vector<2x32xf32>
    %22 = tpu.matmul %13, %21, %cst_19 {dimension_numbers = #tpu.dot_dimension_numbers<[1], [0], [0], [1], [0, 0, 1, 1], [], []>} : vector<2x32xf32>, vector<32x32xf32>, vector<2x32xf32> -> vector<2x32xf32>
    %c0_20 = arith.constant 0 : index
    %c0_21 = arith.constant 0 : index
    %23 = vector.load %arg9[%c0_20, %c0_21] : memref<1x32xf32, #tpu.memory_space<vmem>>, vector<1x32xf32>
    %24 = vector.broadcast %23 : vector<1x32xf32> to vector<2x32xf32>
    %25 = arith.addf %22, %24 : vector<2x32xf32>
    %cst_22 = arith.constant 0.000000e+00 : f32
    %26 = vector.broadcast %cst_22 : f32 to vector<2x32xf32>
    %27 = arith.maximumf %25, %26 : vector<2x32xf32>
    %c0_23 = arith.constant 0 : index
    %c0_24 = arith.constant 0 : index
    %28 = vector.load %arg10[%c0_23, %c0_24] : memref<2x32xf32, #tpu.memory_space<vmem>>, vector<2x32xf32>
    %c0_25 = arith.constant 0 : index
    %c0_26 = arith.constant 0 : index
    %29 = vector.load %arg11[%c0_25, %c0_26] : memref<1x2xf32, #tpu.memory_space<vmem>>, vector<1x2xf32>
    %30 = vector.extract_strided_slice %28 {offsets = [0, 0], sizes = [1, 32], strides = [1, 1]} : vector<2x32xf32> to vector<1x32xf32>
    %31 = vector.broadcast %30 : vector<1x32xf32> to vector<2x32xf32>
    %32 = arith.mulf %20, %31 : vector<2x32xf32>
    %cst_27 = arith.constant dense<0.000000e+00> : vector<2xf32>
    %33 = vector.multi_reduction <add>, %32, %cst_27 [1] : vector<2x32xf32> to vector<2xf32>
    %34 = vector.shape_cast %33 : vector<2xf32> to vector<2x1xf32>
    %35 = vector.extract_strided_slice %29 {offsets = [0, 0], sizes = [1, 1], strides = [1, 1]} : vector<1x2xf32> to vector<1x1xf32>
    %36 = vector.broadcast %35 : vector<1x1xf32> to vector<2x1xf32>
    %37 = arith.addf %34, %36 : vector<2x1xf32>
    %38 = vector.extract_strided_slice %28 {offsets = [1, 0], sizes = [1, 32], strides = [1, 1]} : vector<2x32xf32> to vector<1x32xf32>
    %39 = vector.broadcast %38 : vector<1x32xf32> to vector<2x32xf32>
    %40 = arith.mulf %27, %39 : vector<2x32xf32>
    %cst_28 = arith.constant dense<0.000000e+00> : vector<2xf32>
    %41 = vector.multi_reduction <add>, %40, %cst_28 [1] : vector<2x32xf32> to vector<2xf32>
    %42 = vector.shape_cast %41 : vector<2xf32> to vector<2x1xf32>
    %43 = vector.extract_strided_slice %29 {offsets = [0, 1], sizes = [1, 1], strides = [1, 1]} : vector<1x2xf32> to vector<1x1xf32>
    %44 = vector.broadcast %43 : vector<1x1xf32> to vector<2x1xf32>
    %45 = arith.addf %42, %44 : vector<2x1xf32>
    %c0_29 = arith.constant 0 : index
    %c0_30 = arith.constant 0 : index
    %46 = vector.load %arg12[%c0_29, %c0_30] : memref<2x2xf32, #tpu.memory_space<vmem>>, vector<2x1xf32>
    tpu.vector_store %arg12[%c0_29, %c0_30], %37 {strides = array<i32>} : memref<2x2xf32, #tpu.memory_space<vmem>>, vector<2x1xf32>,
    %c0_31 = arith.constant 0 : index
    %c1 = arith.constant 1 : index
    %47 = vector.load %arg12[%c0_31, %c1] : memref<2x2xf32, #tpu.memory_space<vmem>>, vector<2x1xf32>
    tpu.vector_store %arg12[%c0_31, %c1], %45 {strides = array<i32>} : memref<2x2xf32, #tpu.memory_space<vmem>>, vector<2x1xf32>,
    return
  }
  func.func @transform_0(%arg0: i32) -> (i32, i32) {
    %c0_i32 = arith.constant 0 : i32
    %c0_i32_0 = arith.constant 0 : i32
    return %arg0, %c0_i32 : i32, i32
  }
  func.func @transform_1(%arg0: i32) -> (i32, i32) {
    %c0_i32 = arith.constant 0 : i32
    %c0_i32_0 = arith.constant 0 : i32
    return %arg0, %c0_i32 : i32, i32
  }
  func.func @transform_2(%arg0: i32) -> (i32, i32) {
    %c0_i32 = arith.constant 0 : i32
    %c0_i32_0 = arith.constant 0 : i32
    %c0_i32_1 = arith.constant 0 : i32
    return %c0_i32, %c0_i32_0 : i32, i32
  }
  func.func @transform_3(%arg0: i32) -> (i32, i32) {
    %c0_i32 = arith.constant 0 : i32
    %c0_i32_0 = arith.constant 0 : i32
    %c0_i32_1 = arith.constant 0 : i32
    return %c0_i32, %c0_i32_0 : i32, i32
  }
  func.func @transform_4(%arg0: i32) -> (i32, i32) {
    %c0_i32 = arith.constant 0 : i32
    %c0_i32_0 = arith.constant 0 : i32
    %c0_i32_1 = arith.constant 0 : i32
    return %c0_i32, %c0_i32_0 : i32, i32
  }
  func.func @transform_5(%arg0: i32) -> (i32, i32) {
    %c0_i32 = arith.constant 0 : i32
    %c0_i32_0 = arith.constant 0 : i32
    %c0_i32_1 = arith.constant 0 : i32
    return %c0_i32, %c0_i32_0 : i32, i32
  }
  func.func @transform_6(%arg0: i32) -> (i32, i32) {
    %c0_i32 = arith.constant 0 : i32
    %c0_i32_0 = arith.constant 0 : i32
    %c0_i32_1 = arith.constant 0 : i32
    return %c0_i32, %c0_i32_0 : i32, i32
  }
  func.func @transform_7(%arg0: i32) -> (i32, i32) {
    %c0_i32 = arith.constant 0 : i32
    %c0_i32_0 = arith.constant 0 : i32
    %c0_i32_1 = arith.constant 0 : i32
    return %c0_i32, %c0_i32_0 : i32, i32
  }
  func.func @transform_8(%arg0: i32) -> (i32, i32) {
    %c0_i32 = arith.constant 0 : i32
    %c0_i32_0 = arith.constant 0 : i32
    %c0_i32_1 = arith.constant 0 : i32
    return %c0_i32, %c0_i32_0 : i32, i32
  }
  func.func @transform_9(%arg0: i32) -> (i32, i32) {
    %c0_i32 = arith.constant 0 : i32
    %c0_i32_0 = arith.constant 0 : i32
    %c0_i32_1 = arith.constant 0 : i32
    return %c0_i32, %c0_i32_0 : i32, i32
  }
  func.func @transform_10(%arg0: i32) -> (i32, i32) {
    %c0_i32 = arith.constant 0 : i32
    %c0_i32_0 = arith.constant 0 : i32
    %c0_i32_1 = arith.constant 0 : i32
    return %c0_i32, %c0_i32_0 : i32, i32
  }
  func.func @transform_11(%arg0: i32) -> (i32, i32) {
    %c0_i32 = arith.constant 0 : i32
    %c0_i32_0 = arith.constant 0 : i32
    return %arg0, %c0_i32 : i32, i32
  }
}

</mosaic_0001>

<llo_original>
// kernel: safe_critic_forward.1
$region0: #{safe_critic_forward.1}
  #allocation0 [shape = 'u32[]', space=smem, size = 0x4, offset = 0x4, fixed_abs, tag = 'smem constant byte address 0x4 - core index']
  #allocation1 [shape = 'u32[72,128]{1,0:T(1,128)}', space=vmem, size = 0x9000, scoped, tag = 'internal scratch']
  %s0 = inlined_call_operand.vmem [shape: f32[2,8], index: 0, kind: input, shape index: {}]
  %s1 = inlined_call_operand.vmem [shape: f32[2,4], index: 1, kind: input, shape index: {}]
  %s2 = inlined_call_operand.vmem [shape: f32[8,64], index: 2, kind: input, shape index: {}]
  %s3 = inlined_call_operand.vmem [shape: f32[4,64], index: 3, kind: input, shape index: {}]
  %s4 = inlined_call_operand.vmem [shape: f32[1,64], index: 4, kind: input, shape index: {}]
  %s5 = inlined_call_operand.vmem [shape: f32[32,32], index: 5, kind: input, shape index: {}]
  %s6 = inlined_call_operand.vmem [shape: f32[1,32], index: 6, kind: input, shape index: {}]
  %s7 = inlined_call_operand.hbm [shape: f32[32,32], index: 7, kind: input, shape index: {}]
  %s8 = inlined_call_operand.vmem [shape: f32[1,32], index: 8, kind: input, shape index: {}]
  %s9 = inlined_call_operand.vmem [shape: f32[2,32], index: 9, kind: input, shape index: {}]
  %s10 = inlined_call_operand.vmem [shape: f32[1,2], index: 10, kind: input, shape index: {}]
  %s11 = inlined_call_operand.vmem [shape: f32[2,2], index: 11, kind: output, shape index: {}]
  %s12 = sld [smem:[#allocation0]]
  $region58: #{safe_critic_forward.1} parent=0
    _
  %s14 = ssub.s32 1, %s12
  %s15 = scalar_select 0, %s14, %s12
  $region1: #{safe_critic_forward.1} parent=0
    #allocation2 [shape = 'u8[16384]{0}', space=vmem, size = 0x4000, scoped, tag = 'input window, operand 7, single buffered']
    #allocation3 [shape = 's32[1]{0}', space=sflag, size = 0x4, scoped, tag = 'scoped memory for safe_critic_forward.1']
    %16 = vsyncpa [#allocation3], 0
    // Predicated region
    $region2: #{safe_critic_forward.1} parent=1 // pred_check
      _
    $region3: #{safe_critic_forward.1} parent=1 // pred_check_branch
      %18 = sbr.rel (0) target = $region5
    $region4: #{safe_critic_forward.1} parent=1 // pred_region
      _
    $region5: #{safe_critic_forward.1} parent=1 // pred_fallthru
      _
    // Predicated region
    $region6: #{safe_critic_forward.1} parent=1 // pred_check
      _
    $region7: #{safe_critic_forward.1} parent=1 // pred_check_branch
      %20 = sbr.rel (0) target = $region9
    $region8: #{safe_critic_forward.1} parent=1 // pred_region
      _
    $region9: #{safe_critic_forward.1} parent=1 // pred_fallthru
      _
    // Predicated region
    $region10: #{safe_critic_forward.1} parent=1 // pred_check
      _
    $region11: #{safe_critic_forward.1} parent=1 // pred_check_branch
      %22 = sbr.rel (0) target = $region13
    $region12: #{safe_critic_forward.1} parent=1 // pred_region
      _
    $region13: #{safe_critic_forward.1} parent=1 // pred_fallthru
      _
    // Predicated region
    $region14: #{safe_critic_forward.1} parent=1 // pred_check
      _
    $region15: #{safe_critic_forward.1} parent=1 // pred_check_branch
      %24 = sbr.rel (0) target = $region17
    $region16: #{safe_critic_forward.1} parent=1 // pred_region
      _
    $region17: #{safe_critic_forward.1} parent=1 // pred_fallthru
      _
    // Predicated region
    $region18: #{safe_critic_forward.1} parent=1 // pred_check
      _
    $region19: #{safe_critic_forward.1} parent=1 // pred_check_branch
      %26 = sbr.rel (0) target = $region21
    $region20: #{safe_critic_forward.1} parent=1 // pred_region
      _
    $region21: #{safe_critic_forward.1} parent=1 // pred_fallthru
      _
    // Predicated region
    $region22: #{safe_critic_forward.1} parent=1 // pred_check
      _
    $region23: #{safe_critic_forward.1} parent=1 // pred_check_branch
      %28 = sbr.rel (0) target = $region25
    $region24: #{safe_critic_forward.1} parent=1 // pred_region
      _
    $region25: #{safe_critic_forward.1} parent=1 // pred_fallthru
      _
    // Predicated region
    $region26: #{safe_critic_forward.1} parent=1 // pred_check
      _
    $region27: #{safe_critic_forward.1} parent=1 // pred_check_branch
      %30 = sbr.rel (0) target = $region29
    $region28: #{safe_critic_forward.1} parent=1 // pred_region
      _
    $region29: #{safe_critic_forward.1} parent=1 // pred_fallthru
      _
    // Predicated region
    $region30: #{safe_critic_forward.1} parent=1 // pred_check
      _
    $region31: #{safe_critic_forward.1} parent=1 // pred_check_branch
      %32 = sbr.rel (0) target = $region33
    $region32: #{safe_critic_forward.1} parent=1 // pred_region
      %34 = vsyncadd [#allocation3], 0
      %s35 = sshll.u32 %s7, 4
      %s36 = int_to_ptr.hbm [resolvable:$true] %s35
      %s37 = sshll.u32 [#allocation2], 4
      %s38 = int_to_ptr.vmem [resolvable:$true] %s37
      %43 = dma.hbm_to_vmem [thread:$0]  %s36, 512, %s38, [#allocation3], 128, 128, 8
    $region33: #{safe_critic_forward.1} parent=1 // pred_fallthru
      _
    // Predicated region
    $region34: #{safe_critic_forward.1} parent=1 // pred_check
      _
    $region35: #{safe_critic_forward.1} parent=1 // pred_check_branch
      %45 = sbr.rel (0) target = $region37
    $region36: #{safe_critic_forward.1} parent=1 // pred_region
      _
    $region37: #{safe_critic_forward.1} parent=1 // pred_fallthru
      _
    // Predicated region
    $region38: #{safe_critic_forward.1} parent=1 // pred_check
      _
    $region39: #{safe_critic_forward.1} parent=1 // pred_check_branch
      %47 = sbr.rel (0) target = $region41
    $region40: #{safe_critic_forward.1} parent=1 // pred_region
      _
    $region41: #{safe_critic_forward.1} parent=1 // pred_fallthru
      _
    // Predicated region
    $region42: #{safe_critic_forward.1} parent=1 // pred_check
      _
    $region43: #{safe_critic_forward.1} parent=1 // pred_check_branch
      %49 = sbr.rel (0) target = $region45
    $region44: #{safe_critic_forward.1} parent=1 // pred_region
      _
    $region45: #{safe_critic_forward.1} parent=1 // pred_fallthru
      _
    // Predicated region
    $region46: #{safe_critic_forward.1} parent=1 // pred_check
      _
    $region47: #{safe_critic_forward.1} parent=1 // pred_check_branch
      %51 = sbr.rel (0) target = $region49
    $region48: #{safe_critic_forward.1} parent=1 // pred_region
      %53 = dma.done [#allocation3], 512
    $region49: #{safe_critic_forward.1} parent=1 // pred_fallthru
      _
    %v54 = vld [vmem:[%s0] sm:$0x3]
    %v55 = vld [vmem:[%s2] sm:$0xff]
    %v56 = vld [vmem:[%s1] sm:$0x3]
    %v57 = vld [vmem:[%s3] sm:$0xf]
    %vm58 = vcmask 31744
    %v60 = vsel %vm58, %v56, 0
    %vm62 = vcmask 1043456
    %v64 = vsel %vm62, %v57, 0
    %66 = vmatpush.msra.mxu0 0.0
    %67 = vmatpush.msra.mxu0 0.0
    %68 = vmatpush.msra.mxu0 0.0
    %69 = vmatpush.msra.mxu0 0.0
    %70 = vmatpush.msra.mxu0 0.0
    %71 = vmatpush.msra.mxu0 0.0
    %72 = vmatpush.msra.mxu0 0.0
    %73 = vmatpush.msra.mxu0 0.0
    %74 = vmatpush.msra.mxu0 0.0
    %75 = vmatpush.msra.mxu0 0.0
    %76 = vmatpush.msra.mxu0 0.0
    %77 = vmatpush.msra.mxu0 0.0
    %78 = vmatpush.msra.mxu0 0.0
    %79 = vmatpush.msra.mxu0 0.0
    %80 = vmatpush.msra.mxu0 0.0
    %81 = vmatpush.msra.mxu0 %v64
    %82 = vmatmul.f32.gmra.mxu0 %v60
    %v83 = vpop.f32.mrf.mxu0
    %v84 = vadd.f32 0.0, %v83
    %85 = vdwg.mxu0
    %vm86 = vcmask 64512
    %v88 = vsel %vm86, %v54, 0
    %90 = vmatpush.msra.mxu0 0.0
    %91 = vmatpush.msra.mxu0 0.0
    %92 = vmatpush.msra.mxu0 0.0
    %93 = vmatpush.msra.mxu0 0.0
    %94 = vmatpush.msra.mxu0 0.0
    %95 = vmatpush.msra.mxu0 0.0
    %96 = vmatpush.msra.mxu0 0.0
    %97 = vmatpush.msra.mxu0 0.0
    %98 = vmatpush.msra.mxu0 0.0
    %99 = vmatpush.msra.mxu0 0.0
    %100 = vmatpush.msra.mxu0 0.0
    %101 = vmatpush.msra.mxu0 0.0
    %102 = vmatpush.msra.mxu0 0.0
    %103 = vmatpush.msra.mxu0 0.0
    %104 = vmatpush.msra.mxu0 0.0
    %105 = vmatpush.msra.mxu0 %v55
    %106 = vmatmul.f32.gmra.mxu0 %v88
    %v107 = vpop.f32.mrf.mxu0
    %v108 = vadd.f32 %v84, %v107
    %109 = vdwg.mxu0
    %v110 = vld [vmem:[%s4] sm:$0x1]
    %v112 = vperm.slane %v110, 0
    %v114 = vadd.f32 %v108, %v112
    %v115 = vmax.f32 %v114, 0.0
    %v116 = vld [vmem:[%s5] sm:$0xff]
    %v117 = vld [vmem:[%s5 + $0x8] sm:$0xff]
    %v118 = vld [vmem:[%s5 + $0x10] sm:$0xff]
    %v119 = vld [vmem:[%s5 + $0x18] sm:$0xff]
    %v120 = vld [vmem:[%s6] sm:$0x1]
    %v122 = vperm.slane %v120, 0
    %vm124 = vcmask 261120
    %v126 = vsel %vm124, %v115, 0
    %128 = vmatpush.msra.mxu0 0.0
    %129 = vmatpush.msra.mxu0 0.0
    %130 = vmatpush.msra.mxu0 0.0
    %131 = vmatpush.msra.mxu0 0.0
    %132 = vmatpush.msra.mxu0 0.0
    %133 = vmatpush.msra.mxu0 0.0
    %134 = vmatpush.msra.mxu0 0.0
    %135 = vmatpush.msra.mxu0 0.0
    %136 = vmatpush.msra.mxu0 0.0
    %137 = vmatpush.msra.mxu0 0.0
    %138 = vmatpush.msra.mxu0 0.0
    %139 = vmatpush.msra.mxu0 0.0
    %140 = vmatpush.msra.mxu0 %v119
    %141 = vmatpush.msra.mxu0 %v118
    %142 = vmatpush.msra.mxu0 %v117
    %143 = vmatpush.msra.mxu0 %v116
    %144 = vmatmul.f32.gmra.mxu0 %v126
    %v145 = vpop.f32.mrf.mxu0
    %v146 = vadd.f32 %v122, %v145
    %147 = vdwg.mxu0
    %v148 = vmax.f32 %v146, 0.0
    %v149 = vld [vmem:[#allocation2] sm:$0xff]
    %v150 = vld [vmem:[#allocation2 + $0x8] sm:$0xff]
    %v151 = vld [vmem:[#allocation2 + $0x10] sm:$0xff]
    %v152 = vld [vmem:[#allocation2 + $0x18] sm:$0xff]
    %v153 = vld [vmem:[%s8] sm:$0x1]
    %v155 = vperm.slane %v153, 0
    %157 = vrot.lane.b32.xlu0 %v115, 96
    %v158 = vpop.permute.xlu0 %157
    %v159 = vsel %vm124, %v158, 0
    %161 = vmatpush.msra.mxu0 0.0
    %162 = vmatpush.msra.mxu0 0.0
    %163 = vmatpush.msra.mxu0 0.0
    %164 = vmatpush.msra.mxu0 0.0
    %165 = vmatpush.msra.mxu0 0.0
    %166 = vmatpush.msra.mxu0 0.0
    %167 = vmatpush.msra.mxu0 0.0
    %168 = vmatpush.msra.mxu0 0.0
    %169 = vmatpush.msra.mxu0 0.0
    %170 = vmatpush.msra.mxu0 0.0
    %171 = vmatpush.msra.mxu0 0.0
    %172 = vmatpush.msra.mxu0 0.0
    %173 = vmatpush.msra.mxu0 %v152
    %174 = vmatpush.msra.mxu0 %v151
    %175 = vmatpush.msra.mxu0 %v150
    %176 = vmatpush.msra.mxu0 %v149
    %177 = vmatmul.f32.gmra.mxu0 %v159
    %v178 = vpop.f32.mrf.mxu0
    %v179 = vadd.f32 %v155, %v178
    %180 = vdwg.mxu0
    %v181 = vmax.f32 %v179, 0.0
    %v182 = vld [vmem:[%s9] sm:$0x3]
    %v183 = vld [vmem:[%s10] sm:$0x1]
    %v184 = vperm.slane %v182, 0
    %v185 = vmul.f32 %v148, %v184
    %vm186 = vcmask 254976
    %v187 = vsel %vm186, %v185, 0.0
    %188 = vadd.xlane.f32.xlu0 %v187
    %v189 = vpop.xlane.xlu0 %188
    %v191 = vperm.slane %v183, 0
    %v193 = vadd.f32 %v189, %v191
    %v194 = vperm.slane %v182, 1
    %v195 = vmul.f32 %v181, %v194
    %v196 = vsel %vm186, %v195, 0.0
    %197 = vadd.xlane.f32.xlu0 %v196
    %v198 = vpop.xlane.xlu0 %197
    %v199 = vadd.f32 %v198, %v191
    %vm200 = vcmask 1024
    %201 = vst.msk [vmem:[%s11] sm:$0x3] %vm200, %v193
    %vm202 = vcmask 9224
    %203 = vst.msk [vmem:[%s11] sm:$0x3] %vm202, %v199
    // Predicated region
    $region50: #{safe_critic_forward.1} parent=1 // pred_check
      _
    $region51: #{safe_critic_forward.1} parent=1 // pred_check_branch
      %205 = sbr.rel (0) target = $region53
    $region52: #{safe_critic_forward.1} parent=1 // pred_region
      _
    $region53: #{safe_critic_forward.1} parent=1 // pred_fallthru
      _
    // Predicated region
    $region54: #{safe_critic_forward.1} parent=1 // pred_check
      _
    $region55: #{safe_critic_forward.1} parent=1 // pred_check_branch
      %207 = sbr.rel (0) target = $region57
    $region56: #{safe_critic_forward.1} parent=1 // pred_region
      _
    $region57: #{safe_critic_forward.1} parent=1 // pred_fallthru
      _
    %208 = vsyncpa [#allocation3], 1

</llo_original>
